<compile_context>
chip_gen: v7x
topology: tpu7x:2x2x1
jax: 0.10.0
libtpu: 0.0.40
codegen_flags: <defaults>
</compile_context>

<pallas_src>
import functools

import jax
import jax.numpy as jnp
import numpy as np
from jax.experimental import pallas as pl
from jax.experimental.pallas import tpu as pltpu


NEG_SLOPE = 0.01      # nn.LeakyReLU() default negative_slope
BN_EPS = 1e-5         # nn.BatchNorm1d default eps
HIGHEST = jax.lax.Precision.HIGHEST


def _leaky_relu(x):
    return jnp.where(x > 0, x, jnp.float32(NEG_SLOPE) * x)


def _round_up(x, m):
    return ((x + m - 1) // m) * m


def dti_conv3_kernel(msg_ref, w2_ref, w3_ref, consts_ref, out_ref):
    """msg_ref   : [tile_e, D] bf16 -- layer-1 pre-activation (built in wrapper)
       w2_ref    : [D, D]      bf16
       w3_ref    : [D, D]      bf16
       consts_ref: [8, D]      f32  -- rows: b2, b3, bn_scale, bn_shift, 0...
       out_ref   : [tile_e, D] f32
    """
    b2 = consts_ref[0:1, :]
    b3 = consts_ref[1:2, :]
    scale = consts_ref[2:3, :]
    shift = consts_ref[3:4, :]

    # Layer 1 activation (pre-activation arrives from the wrapper).
    y = _leaky_relu(msg_ref[...].astype(jnp.float32))
    # Layers 2/3: bf16 MXU operands, f32 accumulation, f32 elementwise math.
    y = jnp.dot(y.astype(jnp.bfloat16), w2_ref[...],
                preferred_element_type=jnp.float32) + b2
    y = _leaky_relu(y)
    y = jnp.dot(y.astype(jnp.bfloat16), w3_ref[...],
                preferred_element_type=jnp.float32) + b3
    y = _leaky_relu(y)
    # Dropout = identity (eval); BatchNorm1d (eval) folded into scale/shift.
    out_ref[...] = y * scale + shift


@functools.partial(jax.jit, static_argnames=("tile_e",))
def dti_conv_graph3_layer(src, dst, atom_feats, bond_feats, params, *, tile_e=None):
    E, Fb = bond_feats.shape
    N, Fa = atom_feats.shape
    D = params["w2"].shape[0]

    # --- Tile size: large for MXU M-fill and step-overhead amortization, but
    # clamped so the grid keeps >= 2 tiles (both v7x TensorCores get work).
    # Multiple of 16 for clean bf16 (16,128) sublane packing.  Per-tile VMEM is
    # tiny (tile_e=1024, D=128: ~1.6 MiB double-buffered, well under limits).
    if tile_e is None:
        tile_e = max(16, min(1024, _round_up(pl.cdiv(E, 2), 16)))
    n_tiles = pl.cdiv(E, tile_e)
    e_pad = n_tiles * tile_e

    # --- Split Linear1: concat([bond, m]) @ W1 == bond @ W1[:Fb] + m @ W1[Fb:].
    w1_bond = params["w1"][:Fb]          # [Fb, D]
    w1_node = params["w1"][Fb:]          # [Fa, D]

    # Project node features once per NODE (not per edge), then gather per edge.
    # TODO(synk): the data-dependent u_add_v gather over the edge list stays in
    # XLA; an in-kernel version would need scalar-prefetch-driven DMA gathers.
    hp = jnp.dot(atom_feats, w1_node, precision=HIGHEST)            # [N, D]

    # Pad only the cheap per-edge arrays (int32 indices + narrow bond features)
    # so the big [E, D] message stream is produced directly at padded length.
    pad = e_pad - E
    src_p = jnp.pad(src, (0, pad))                                  # pad idx -> 0 (valid)
    dst_p = jnp.pad(dst, (0, pad))
    bond_p = jnp.pad(bond_feats, ((0, pad), (0, 0)))

    # Full layer-1 pre-activation in the wrapper (fused by XLA).
    msg = (jnp.take(hp, src_p, axis=0) + jnp.take(hp, dst_p, axis=0)
           + jnp.dot(bond_p, w1_bond, precision=HIGHEST)
           + params["b1"][None, :])                                  # [e_pad, D] f32
    msg_bf16 = msg.astype(jnp.bfloat16)                              # halves HBM stream

    # Fold eval-mode BatchNorm1d into one scale/shift; stack all per-channel
    # constants into a single (8, D) grid-invariant block.
    scale = params["bn_gamma"] * jax.lax.rsqrt(params["bn_var"] + BN_EPS)
    shift = params["bn_beta"] - params["bn_mean"] * scale
    consts = jnp.concatenate(
        [params["b2"][None], params["b3"][None], scale[None], shift[None],
         jnp.zeros((4, D), jnp.float32)], axis=0)                    # [8, D]

    w2 = params["w2"].astype(jnp.bfloat16)
    w3 = params["w3"].astype(jnp.bfloat16)

    edge = lambda i: (i, 0)      # per-edge-tile blocks
    const = lambda i: (0, 0)     # same block every grid step (no re-fetch)

    out = pl.pallas_call(
        dti_conv3_kernel,
        out_shape=jax.ShapeDtypeStruct((e_pad, D), jnp.float32),
        grid=(n_tiles,),
        in_specs=[
            pl.BlockSpec((tile_e, D), edge),    # msg (layer-1 pre-activation), bf16
            pl.BlockSpec((D, D), const),        # W2, bf16
            pl.BlockSpec((D, D), const),        # W3, bf16
            pl.BlockSpec((8, D), const),        # stacked b2/b3/bn_scale/bn_shift, f32
        ],
        out_specs=pl.BlockSpec((tile_e, D), edge),
        compiler_params=pltpu.CompilerParams(
            dimension_semantics=("parallel",)),  # megacore-shardable on v7x
    )(msg_bf16, w2, w3, consts)

    return out[:E]


def reference(src, dst, atom_feats, bond_feats, params):
    """Pure-JAX f32 reference mirroring the PyTorch forward (eval mode)."""
    m = atom_feats[src] + atom_feats[dst]
    x = jnp.concatenate([bond_feats, m], axis=1)
    y = jnp.dot(x, params["w1"], precision=HIGHEST) + params["b1"]
    y = jnp.where(y > 0, y, NEG_SLOPE * y)
    y = jnp.dot(y, params["w2"], precision=HIGHEST) + params["b2"]
    y = jnp.where(y > 0, y, NEG_SLOPE * y)
    y = jnp.dot(y, params["w3"], precision=HIGHEST) + params["b3"]
    y = jnp.where(y > 0, y, NEG_SLOPE * y)
    scale = params["bn_gamma"] / jnp.sqrt(params["bn_var"] + BN_EPS)
    return (y - params["bn_mean"]) * scale + params["bn_beta"]


def init_params(key, in_dim, out_dim):
    """Deterministic init; Linear weights stored transposed ([in, out])."""
    ks = jax.random.split(key, 10)

    def u(k, shape, fan_in):
        bound = 1.0 / np.sqrt(fan_in)
        return jax.random.uniform(k, shape, jnp.float32, -bound, bound)

    return {
        "w1": u(ks[0], (in_dim, out_dim), in_dim),  "b1": u(ks[1], (out_dim,), in_dim),
        "w2": u(ks[2], (out_dim, out_dim), out_dim), "b2": u(ks[3], (out_dim,), out_dim),
        "w3": u(ks[4], (out_dim, out_dim), out_dim), "b3": u(ks[5], (out_dim,), out_dim),
        # BatchNorm1d (eval): weight, bias, running_mean, running_var
        "bn_gamma": jax.random.uniform(ks[6], (out_dim,), jnp.float32, 0.5, 1.5),
        "bn_beta":  jax.random.normal(ks[7], (out_dim,), jnp.float32) * 0.1,
        "bn_mean":  jax.random.normal(ks[8], (out_dim,), jnp.float32) * 0.1,
        "bn_var":   jax.random.uniform(ks[9], (out_dim,), jnp.float32, 0.5, 1.5),
    }


if __name__ == "__main__":
    N = 32       # graph nodes
    E = 250      # graph edges (arbitrary; index/bond vectors padded internally)
    Fa = 40      # atom / node feature size
    Fb = 24      # bond / edge feature size
    D = 128      # out_dim (lane-dense: multiple of 128)
    in_dim = Fb + Fa

    root = jax.random.PRNGKey(0)
    k_src, k_dst, k_h, k_e, k_par = jax.random.split(root, 5)

    src = jax.random.randint(k_src, (E,), 0, N, dtype=jnp.int32)
    dst = jax.random.randint(k_dst, (E,), 0, N, dtype=jnp.int32)
    atom_feats = jax.random.normal(k_h, (N, Fa), jnp.float32)
    bond_feats = jax.random.normal(k_e, (E, Fb), jnp.float32)
    params = init_params(k_par, in_dim, D)

    out = dti_conv_graph3_layer(src, dst, atom_feats, bond_feats, params)
    out = jax.block_until_ready(out)

    ref = reference(src, dst, atom_feats, bond_feats, params)
    # Tolerance sized for bf16 MXU operands (f32 accumulation) vs the f32 reference.
    np.testing.assert_allclose(np.asarray(out), np.asarray(ref), rtol=2e-2, atol=2e-2)

    print("KERNEL_OK")
</pallas_src>

<mosaic_0001>
module attributes {stable_mosaic.version = 11 : i64} {
  func.func @dti_conv3_kernel(%arg0: i32, %arg1: memref<128x128xbf16, #tpu.memory_space<vmem>>, %arg2: memref<128x128xbf16, #tpu.memory_space<vmem>>, %arg3: memref<128x128xbf16, #tpu.memory_space<vmem>>, %arg4: memref<8x128xf32, #tpu.memory_space<vmem>>, %arg5: memref<128x128xf32, #tpu.memory_space<vmem>>) attributes {dimension_semantics = [#tpu.dimension_semantics<parallel>], iteration_bounds = array<i64: 2>, scalar_prefetch = 0 : i64, scratch_operands = 0 : i64, tpu.core_type = #tpu.core_type<tc>, window_params = [{transform_indices = @transform_0, window_bounds = array<i64: 128, 128>}, {pipeline_mode = #tpu.pipeline_mode<synchronous>, transform_indices = @transform_1, window_bounds = array<i64: 128, 128>}, {pipeline_mode = #tpu.pipeline_mode<synchronous>, transform_indices = @transform_2, window_bounds = array<i64: 128, 128>}, {pipeline_mode = #tpu.pipeline_mode<synchronous>, transform_indices = @transform_3, window_bounds = array<i64: 8, 128>}, {transform_indices = @transform_4, window_bounds = array<i64: 128, 128>}]} {
    %c0 = arith.constant 0 : index
    %c0_0 = arith.constant 0 : index
    %0 = vector.load %arg4[%c0, %c0_0] : memref<8x128xf32, #tpu.memory_space<vmem>>, vector<1x128xf32>
    %c1 = arith.constant 1 : index
    %c0_1 = arith.constant 0 : index
    %1 = vector.load %arg4[%c1, %c0_1] : memref<8x128xf32, #tpu.memory_space<vmem>>, vector<1x128xf32>
    %c2 = arith.constant 2 : index
    %c0_2 = arith.constant 0 : index
    %2 = vector.load %arg4[%c2, %c0_2] : memref<8x128xf32, #tpu.memory_space<vmem>>, vector<1x128xf32>
    %c3 = arith.constant 3 : index
    %c0_3 = arith.constant 0 : index
    %3 = vector.load %arg4[%c3, %c0_3] : memref<8x128xf32, #tpu.memory_space<vmem>>, vector<1x128xf32>
    %c0_4 = arith.constant 0 : index
    %c0_5 = arith.constant 0 : index
    %4 = vector.load %arg1[%c0_4, %c0_5] : memref<128x128xbf16, #tpu.memory_space<vmem>>, vector<128x128xbf16>
    %5 = arith.extf %4 : vector<128x128xbf16> to vector<128x128xf32>
    %cst = arith.constant 0.000000e+00 : f32
    %6 = vector.broadcast %cst : f32 to vector<128x128xf32>
    %7 = arith.cmpf ogt, %5, %6 : vector<128x128xf32>
    %cst_6 = arith.constant 0.00999999977 : f32
    %8 = vector.broadcast %cst_6 : f32 to vector<128x128xf32>
    %9 = arith.mulf %8, %5 : vector<128x128xf32>
    %10 = arith.select %7, %5, %9 : vector<128x128xi1>, vector<128x128xf32>
    %11 = arith.truncf %10 : vector<128x128xf32> to vector<128x128xbf16>
    %c0_7 = arith.constant 0 : index
    %c0_8 = arith.constant 0 : index
    %12 = vector.load %arg2[%c0_7, %c0_8] : memref<128x128xbf16, #tpu.memory_space<vmem>>, vector<128x128xbf16>
    %cst_9 = arith.constant dense<0.000000e+00> : vector<128x128xf32>
    %13 = tpu.matmul %11, %12, %cst_9 {dimension_numbers = #tpu.dot_dimension_numbers<[1], [0], [0], [1], [0, 0, 1, 1], [], []>} : vector<128x128xbf16>, vector<128x128xbf16>, vector<128x128xf32> -> vector<128x128xf32>
    %14 = vector.broadcast %0 : vector<1x128xf32> to vector<128x128xf32>
    %15 = arith.addf %13, %14 : vector<128x128xf32>
    %cst_10 = arith.constant 0.000000e+00 : f32
    %16 = vector.broadcast %cst_10 : f32 to vector<128x128xf32>
    %17 = arith.cmpf ogt, %15, %16 : vector<128x128xf32>
    %cst_11 = arith.constant 0.00999999977 : f32
    %18 = vector.broadcast %cst_11 : f32 to vector<128x128xf32>
    %19 = arith.mulf %18, %15 : vector<128x128xf32>
    %20 = arith.select %17, %15, %19 : vector<128x128xi1>, vector<128x128xf32>
    %21 = arith.truncf %20 : vector<128x128xf32> to vector<128x128xbf16>
    %c0_12 = arith.constant 0 : index
    %c0_13 = arith.constant 0 : index
    %22 = vector.load %arg3[%c0_12, %c0_13] : memref<128x128xbf16, #tpu.memory_space<vmem>>, vector<128x128xbf16>
    %cst_14 = arith.constant dense<0.000000e+00> : vector<128x128xf32>
    %23 = tpu.matmul %21, %22, %cst_14 {dimension_numbers = #tpu.dot_dimension_numbers<[1], [0], [0], [1], [0, 0, 1, 1], [], []>} : vector<128x128xbf16>, vector<128x128xbf16>, vector<128x128xf32> -> vector<128x128xf32>
    %24 = vector.broadcast %1 : vector<1x128xf32> to vector<128x128xf32>
    %25 = arith.addf %23, %24 : vector<128x128xf32>
    %cst_15 = arith.constant 0.000000e+00 : f32
    %26 = vector.broadcast %cst_15 : f32 to vector<128x128xf32>
    %27 = arith.cmpf ogt, %25, %26 : vector<128x128xf32>
    %cst_16 = arith.constant 0.00999999977 : f32
    %28 = vector.broadcast %cst_16 : f32 to vector<128x128xf32>
    %29 = arith.mulf %28, %25 : vector<128x128xf32>
    %30 = arith.select %27, %25, %29 : vector<128x128xi1>, vector<128x128xf32>
    %31 = vector.broadcast %2 : vector<1x128xf32> to vector<128x128xf32>
    %32 = arith.mulf %30, %31 : vector<128x128xf32>
    %33 = vector.broadcast %3 : vector<1x128xf32> to vector<128x128xf32>
    %34 = arith.addf %32, %33 : vector<128x128xf32>
    %c0_17 = arith.constant 0 : index
    %c0_18 = arith.constant 0 : index
    %35 = vector.load %arg5[%c0_17, %c0_18] : memref<128x128xf32, #tpu.memory_space<vmem>>, vector<128x128xf32>
    tpu.vector_store %arg5[%c0_17, %c0_18], %34 {strides = array<i32>} : memref<128x128xf32, #tpu.memory_space<vmem>>, vector<128x128xf32>,
    return
  }
  func.func @transform_0(%arg0: i32) -> (i32, i32) {
    %c0_i32 = arith.constant 0 : i32
    %c0_i32_0 = arith.constant 0 : i32
    return %arg0, %c0_i32 : i32, i32
  }
  func.func @transform_1(%arg0: i32) -> (i32, i32) {
    %c0_i32 = arith.constant 0 : i32
    %c0_i32_0 = arith.constant 0 : i32
    %c0_i32_1 = arith.constant 0 : i32
    return %c0_i32, %c0_i32_0 : i32, i32
  }
  func.func @transform_2(%arg0: i32) -> (i32, i32) {
    %c0_i32 = arith.constant 0 : i32
    %c0_i32_0 = arith.constant 0 : i32
    %c0_i32_1 = arith.constant 0 : i32
    return %c0_i32, %c0_i32_0 : i32, i32
  }
  func.func @transform_3(%arg0: i32) -> (i32, i32) {
    %c0_i32 = arith.constant 0 : i32
    %c0_i32_0 = arith.constant 0 : i32
    %c0_i32_1 = arith.constant 0 : i32
    return %c0_i32, %c0_i32_0 : i32, i32
  }
  func.func @transform_4(%arg0: i32) -> (i32, i32) {
    %c0_i32 = arith.constant 0 : i32
    %c0_i32_0 = arith.constant 0 : i32
    return %arg0, %c0_i32 : i32, i32
  }
}

</mosaic_0001>

<llo_original>
// kernel: dti_conv_graph3_layer.1
$region0: #{dti_conv_graph3_layer.1}
  #allocation0 [shape = 'u32[]', space=smem, size = 0x4, offset = 0x4, fixed_abs, tag = 'smem constant byte address 0x4 - core index']
  #allocation1 [shape = 'u32[144,128]{1,0:T(1,128)}', space=vmem, size = 0x12000, scoped, tag = 'internal scratch']
  %s0 = inlined_call_operand.vmem [shape: bf16[256,128], index: 0, kind: input, shape index: {}]
  %s1 = inlined_call_operand.vmem [shape: bf16[128,128], index: 1, kind: input, shape index: {}]
  %s2 = inlined_call_operand.vmem [shape: bf16[128,128], index: 2, kind: input, shape index: {}]
  %s3 = inlined_call_operand.vmem [shape: f32[8,128], index: 3, kind: input, shape index: {}]
  %s4 = inlined_call_operand.hbm [shape: f32[256,128], index: 4, kind: output, shape index: {}]
  %s5 = sld [smem:[#allocation0]]
  $region49: #{dti_conv_graph3_layer.1} parent=0
    _
  %s7 = ssub.s32 1, %s5
  %s8 = scalar_select 0, %s7, %s5
  $region1: #{dti_conv_graph3_layer.1} parent=0
    #allocation2 [shape = 'u8[131072]{0}', space=vmem, size = 0x20000, scoped, tag = 'output window, operand 0']
    #allocation3 [shape = 's32[2]{0}', space=sflag, size = 0x8, scoped, tag = 'scoped memory for dti_conv_graph3_layer.1']
    %9 = vsyncpa [#allocation3], 0
    %s10 = scalar_lea.sflag [#allocation3], 1
    %11 = vsyncpa %s10, 0
    loop: start=0, step=1, limit=4
    $region2: #{dti_conv_graph3_layer.1} parent=1 // loop_pre_header
      _
    $region3: #{dti_conv_graph3_layer.1} parent=1 // loop_header
      %s13 = sphi 0, %s17
      %p14 = scmp.ge.s32.totalorder %s13, 4
      %s23 = sphi 0, %s25
      %s26 = sphi 0, %s23
      %s27 = sphi 0, %s26
      %s43 = sphi 0, %s27
      %s47 = sphi 0, %s47
      %s49 = sphi 0, %s47
      %s50 = sphi 0, %s49
      %s64 = sphi 0, %s50
      %s68 = sphi 0, %s68
      %s70 = sphi 0, %s68
      %s71 = sphi 0, %s70
      %s85 = sphi 0, %s71
      %s89 = sphi 0, %s89
      %s91 = sphi 0, %s89
      %s92 = sphi 0, %s91
      %s106 = sphi 0, %s92
      %s112 = sphi 0, %s114
      %s115 = sphi 0, %s112
      %s116 = sphi 0, %s115
      %s132 = sphi 0, %s116
    $region4: #{dti_conv_graph3_layer.1} parent=1 // loop_header_branch
      %16 = sbr.rel (%p14) target = $region8
    $region5: #{dti_conv_graph3_layer.1} parent=1 // loop_body
      %s18 = ssub.s32 %s13, 1
      %s19 = ssub.s32 %s13, 2
      %s20 = sadd.s32 %s13, 1
      %s21 = ssub.s32 %s13, %s20
      %p22 = scmp.eq.s32.totalorder %s21, 0
      %s24 = sadd.s32 %s23, 1
      %s25 = scalar_select %p22, %s23, %s24
      %p28 = pneg %p22
      %p29 = scmp.eq.s32.totalorder %s13, 1
      %p30 = por %p28, %p29
      %p31 = scmp.ne.s32.totalorder %s23, %s26
      %p32 = scmp.eq.s32.totalorder %s13, 0
      %p33 = por %p31, %p32
      %p34 = scmp.ne.s32.totalorder %s23, %s26
      %p35 = scmp.eq.s32.totalorder %s18, 1
      %p36 = por %p34, %p35
      %p37 = scmp.ne.s32.totalorder %s26, %s27
      %p38 = scmp.eq.s32.totalorder %s18, 0
      %p39 = por %p37, %p38
      %p40 = scmp.ne.s32.totalorder %s26, %s27
      %p41 = scmp.eq.s32.totalorder %s19, 1
      %p42 = por %p40, %p41
      %p44 = scmp.ne.s32.totalorder %s27, %s43
      %p45 = scmp.eq.s32.totalorder %s19, 0
      %p46 = por %p44, %p45
      %s48 = sadd.s32 %s47, 1
      %p51 = scmp.eq.s32.totalorder %s13, 1
      %p52 = scmp.ne.s32.totalorder %s47, %s49
      %p53 = scmp.eq.s32.totalorder %s13, 0
      %p54 = por %p52, %p53
      %p55 = scmp.ne.s32.totalorder %s47, %s49
      %p56 = scmp.eq.s32.totalorder %s18, 1
      %p57 = por %p55, %p56
      %p58 = scmp.ne.s32.totalorder %s49, %s50
      %p59 = scmp.eq.s32.totalorder %s18, 0
      %p60 = por %p58, %p59
      %p61 = scmp.ne.s32.totalorder %s49, %s50
      %p62 = scmp.eq.s32.totalorder %s19, 1
      %p63 = por %p61, %p62
      %p65 = scmp.ne.s32.totalorder %s50, %s64
      %p66 = scmp.eq.s32.totalorder %s19, 0
      %p67 = por %p65, %p66
      %s69 = sadd.s32 %s68, 1
      %p72 = scmp.eq.s32.totalorder %s13, 1
      %p73 = scmp.ne.s32.totalorder %s68, %s70
      %p74 = scmp.eq.s32.totalorder %s13, 0
      %p75 = por %p73, %p74
      %p76 = scmp.ne.s32.totalorder %s68, %s70
      %p77 = scmp.eq.s32.totalorder %s18, 1
      %p78 = por %p76, %p77
      %p79 = scmp.ne.s32.totalorder %s70, %s71
      %p80 = scmp.eq.s32.totalorder %s18, 0
      %p81 = por %p79, %p80
      %p82 = scmp.ne.s32.totalorder %s70, %s71
      %p83 = scmp.eq.s32.totalorder %s19, 1
      %p84 = por %p82, %p83
      %p86 = scmp.ne.s32.totalorder %s71, %s85
      %p87 = scmp.eq.s32.totalorder %s19, 0
      %p88 = por %p86, %p87
      %s90 = sadd.s32 %s89, 1
      %p93 = scmp.eq.s32.totalorder %s13, 1
      %p94 = scmp.ne.s32.totalorder %s89, %s91
      %p95 = scmp.eq.s32.totalorder %s13, 0
      %p96 = por %p94, %p95
      %p97 = scmp.ne.s32.totalorder %s89, %s91
      %p98 = scmp.eq.s32.totalorder %s18, 1
      %p99 = por %p97, %p98
      %p100 = scmp.ne.s32.totalorder %s91, %s92
      %p101 = scmp.eq.s32.totalorder %s18, 0
      %p102 = por %p100, %p101
      %p103 = scmp.ne.s32.totalorder %s91, %s92
      %p104 = scmp.eq.s32.totalorder %s19, 1
      %p105 = por %p103, %p104
      %p107 = scmp.ne.s32.totalorder %s92, %s106
      %p108 = scmp.eq.s32.totalorder %s19, 0
      %p109 = por %p107, %p108
      %s110 = ssub.s32 %s13, %s20
      %p111 = scmp.eq.s32.totalorder %s110, 0
      %s113 = sadd.s32 %s112, 1
      %s114 = scalar_select %p111, %s112, %s113
      %p117 = pneg %p111
      %p118 = scmp.eq.s32.totalorder %s13, 1
      %p119 = por %p117, %p118
      %p120 = scmp.ne.s32.totalorder %s112, %s115
      %p121 = scmp.eq.s32.totalorder %s13, 0
      %p122 = por %p120, %p121
      %p123 = scmp.ne.s32.totalorder %s112, %s115
      %p124 = scmp.eq.s32.totalorder %s18, 1
      %p125 = por %p123, %p124
      %p126 = scmp.ne.s32.totalorder %s115, %s116
      %p127 = scmp.eq.s32.totalorder %s18, 0
      %p128 = por %p126, %p127
      %p129 = scmp.ne.s32.totalorder %s115, %s116
      %p130 = scmp.eq.s32.totalorder %s19, 1
      %p131 = por %p129, %p130
      %p133 = scmp.ne.s32.totalorder %s116, %s132
      %p134 = scmp.eq.s32.totalorder %s19, 0
      %p135 = por %p133, %p134
      %p136 = scmp.le.s32.totalorder 1, %s13
      %p137 = scmp.lt.s32.totalorder %s13, 3
      %p138 = pnand %p136, %p137
      %p139 = pneg %p138
      // Predicated region
      $region9: #{dti_conv_graph3_layer.1} parent=5 // pred_check
        _
      $region10: #{dti_conv_graph3_layer.1} parent=5 // pred_check_branch
        %141 = sbr.rel (%p138) target = $region12
      $region11: #{dti_conv_graph3_layer.1} parent=5 // pred_region
        %s142 = ssub.s32 %s13, 1
        // Predicated region
        $region13: #{dti_conv_graph3_layer.1} parent=11 // pred_check
          %p143 = pneg %p60
        $region14: #{dti_conv_graph3_layer.1} parent=11 // pred_check_branch
          %145 = sbr.rel (%p143) target = $region16
        $region15: #{dti_conv_graph3_layer.1} parent=11 // pred_region
          _
        $region16: #{dti_conv_graph3_layer.1} parent=11 // pred_fallthru
          _
        // Predicated region
        $region17: #{dti_conv_graph3_layer.1} parent=11 // pred_check
          %p146 = pneg %p81
        $region18: #{dti_conv_graph3_layer.1} parent=11 // pred_check_branch
          %148 = sbr.rel (%p146) target = $region20
        $region19: #{dti_conv_graph3_layer.1} parent=11 // pred_region
          _
        $region20: #{dti_conv_graph3_layer.1} parent=11 // pred_fallthru
          _
        // Predicated region
        $region21: #{dti_conv_graph3_layer.1} parent=11 // pred_check
          %p149 = pneg %p102
        $region22: #{dti_conv_graph3_layer.1} parent=11 // pred_check_branch
          %151 = sbr.rel (%p149) target = $region24
        $region23: #{dti_conv_graph3_layer.1} parent=11 // pred_region
          _
        $region24: #{dti_conv_graph3_layer.1} parent=11 // pred_fallthru
          _
      $region12: #{dti_conv_graph3_layer.1} parent=5 // pred_fallthru
        _
      %p152 = scmp.lt.s32.totalorder %s13, 2
      // Predicated region
      $region25: #{dti_conv_graph3_layer.1} parent=5 // pred_check
        %p153 = pneg %p152
      $region26: #{dti_conv_graph3_layer.1} parent=5 // pred_check_branch
        %155 = sbr.rel (%p153) target = $region28
      $region27: #{dti_conv_graph3_layer.1} parent=5 // pred_region
        // Predicated region
        $region29: #{dti_conv_graph3_layer.1} parent=27 // pred_check
          %p156 = pneg %p33
        $region30: #{dti_conv_graph3_layer.1} parent=27 // pred_check_branch
          %158 = sbr.rel (%p156) target = $region32
        $region31: #{dti_conv_graph3_layer.1} parent=27 // pred_region
          %s159 = smul.u32 16, %s13
          %p160 = scmp.lt.s32.totalorder %s159, 31
          %s161 = scalar_select %p160, %s159, 31
          %s162 = smul.addr %s161, 4
          %s163 = scalar_lea.vmem %s0, %s162
          %s164 = smul.u32 16, %s13
        $region32: #{dti_conv_graph3_layer.1} parent=27 // pred_fallthru
          _
      $region28: #{dti_conv_graph3_layer.1} parent=5 // pred_fallthru
        _
      %p165 = scmp.le.s32.totalorder 1, %s13
      %p166 = scmp.lt.s32.totalorder %s13, 3
      %p167 = pnand %p165, %p166
      %p168 = pneg %p167
      // Predicated region
      $region33: #{dti_conv_graph3_layer.1} parent=5 // pred_check
        _
      $region34: #{dti_conv_graph3_layer.1} parent=5 // pred_check_branch
        %170 = sbr.rel (%p167) target = $region36
      $region35: #{dti_conv_graph3_layer.1} parent=5 // pred_region
        %s171 = ssub.s32 %s13, 1
        %s172 = smul.u32 16, %s18
        %p173 = scmp.lt.s32.totalorder %s172, 31
        %s174 = scalar_select %p173, %s172, 31
        %s175 = smul.addr %s174, 4
        %s176 = scalar_lea.vmem %s0, %s175
        %p177 = pneg %p39
        %p178 = pneg %p36
        %p179 = pneg %p60
        %p180 = pneg %p57
        %p181 = pneg %p81
        %p182 = pneg %p78
        %p183 = pneg %p102
        %p184 = pneg %p99
        %p185 = pneg %p128
        %p186 = pneg %p125
        %s187 = sand.u32 %s115, 1
        %s188 = scalar_lea.sflag [#allocation3], %s187
        %s189 = sand.u32 %s115, 1
        %s190 = smul.addr %s189, 128
        %s191 = scalar_lea.vmem [#allocation2], %s190
        %s192 = smul.u32 16, %s18
        %p193 = scmp.lt.s32.totalorder %s192, 31
        %s194 = scalar_select %p193, %s192, 31
        %s195 = smul.addr %s194, 4
        %s196 = scalar_lea.vmem %s0, %s195
        %s197 = smul.u32 16, %s18
        %s198 = smul.u32 16, %s18
        %v200 = vld [vmem:[%s3] sm:$0x1]
        %v201 = vld [vmem:[%s3 + $0x1] sm:$0x1]
        %v202 = vld [vmem:[%s3 + $0x2] sm:$0x1]
        %v203 = vld [vmem:[%s3 + $0x3] sm:$0x1]
        %v204 = vld [vmem:[%s196] sm:$0xf]
        %v205 = vld [vmem:[%s196 + $0x4] sm:$0xf]
        %v206 = vld [vmem:[%s196 + $0x8] sm:$0xf]
        %v207 = vld [vmem:[%s196 + $0xc] sm:$0xf]
        %v208 = vld [vmem:[%s196 + $0x10] sm:$0xf]
        %v209 = vld [vmem:[%s196 + $0x14] sm:$0xf]
        %v210 = vld [vmem:[%s196 + $0x18] sm:$0xf]
        %v211 = vld [vmem:[%s196 + $0x1c] sm:$0xf]
        %v212 = vld [vmem:[%s196 + $0x20] sm:$0xf]
        %v213 = vld [vmem:[%s196 + $0x24] sm:$0xf]
        %v214 = vld [vmem:[%s196 + $0x28] sm:$0xf]
        %v215 = vld [vmem:[%s196 + $0x2c] sm:$0xf]
        %v216 = vld [vmem:[%s196 + $0x30] sm:$0xf]
        %v217 = vld [vmem:[%s196 + $0x34] sm:$0xf]
        %v218 = vld [vmem:[%s196 + $0x38] sm:$0xf]
        %v219 = vld [vmem:[%s196 + $0x3c] sm:$0xf]
        %v220 = vunpack.c.l.bf16 %v204
        %v221 = vunpack.c.l.bf16 %v205
        %v222 = vunpack.c.l.bf16 %v206
        %v223 = vunpack.c.l.bf16 %v207
        %v224 = vunpack.c.l.bf16 %v208
        %v225 = vunpack.c.l.bf16 %v209
        %v226 = vunpack.c.l.bf16 %v210
        %v227 = vunpack.c.l.bf16 %v211
        %v228 = vunpack.c.l.bf16 %v212
        %v229 = vunpack.c.l.bf16 %v213
        %v230 = vunpack.c.l.bf16 %v214
        %v231 = vunpack.c.l.bf16 %v215
        %v232 = vunpack.c.l.bf16 %v216
        %v233 = vunpack.c.l.bf16 %v217
        %v234 = vunpack.c.l.bf16 %v218
        %v235 = vunpack.c.l.bf16 %v219
        %vm236 = vcmp.gt.f32.partialorder %v220, 0.0
        %vm237 = vcmp.gt.f32.partialorder %v221, 0.0
        %vm238 = vcmp.gt.f32.partialorder %v222, 0.0
        %vm239 = vcmp.gt.f32.partialorder %v223, 0.0
        %vm240 = vcmp.gt.f32.partialorder %v224, 0.0
        %vm241 = vcmp.gt.f32.partialorder %v225, 0.0
        %vm242 = vcmp.gt.f32.partialorder %v226, 0.0
        %vm243 = vcmp.gt.f32.partialorder %v227, 0.0
        %vm244 = vcmp.gt.f32.partialorder %v228, 0.0
        %vm245 = vcmp.gt.f32.partialorder %v229, 0.0
        %vm246 = vcmp.gt.f32.partialorder %v230, 0.0
        %vm247 = vcmp.gt.f32.partialorder %v231, 0.0
        %vm248 = vcmp.gt.f32.partialorder %v232, 0.0
        %vm249 = vcmp.gt.f32.partialorder %v233, 0.0
        %vm250 = vcmp.gt.f32.partialorder %v234, 0.0
        %vm251 = vcmp.gt.f32.partialorder %v235, 0.0
        %v252 = vmul.f32 %v220, 0.01
        %v253 = vmul.f32 %v221, 0.01
        %v254 = vmul.f32 %v222, 0.01
        %v255 = vmul.f32 %v223, 0.01
        %v256 = vmul.f32 %v224, 0.01
        %v257 = vmul.f32 %v225, 0.01
        %v258 = vmul.f32 %v226, 0.01
        %v259 = vmul.f32 %v227, 0.01
        %v260 = vmul.f32 %v228, 0.01
        %v261 = vmul.f32 %v229, 0.01
        %v262 = vmul.f32 %v230, 0.01
        %v263 = vmul.f32 %v231, 0.01
        %v264 = vmul.f32 %v232, 0.01
        %v265 = vmul.f32 %v233, 0.01
        %v266 = vmul.f32 %v234, 0.01
        %v267 = vmul.f32 %v235, 0.01
        %v268 = vsel %vm236, %v220, %v252
        %v269 = vsel %vm237, %v221, %v253
        %v270 = vsel %vm238, %v222, %v254
        %v271 = vsel %vm239, %v223, %v255
        %v272 = vsel %vm240, %v224, %v256
        %v273 = vsel %vm241, %v225, %v257
        %v274 = vsel %vm242, %v226, %v258
        %v275 = vsel %vm243, %v227, %v259
        %v276 = vsel %vm244, %v228, %v260
        %v277 = vsel %vm245, %v229, %v261
        %v278 = vsel %vm246, %v230, %v262
        %v279 = vsel %vm247, %v231, %v263
        %v280 = vsel %vm248, %v232, %v264
        %v281 = vsel %vm249, %v233, %v265
        %v282 = vsel %vm250, %v234, %v266
        %v283 = vsel %vm251, %v235, %v267
        %v284 = vpack.c.bf16 %v269, %v268
        %v285 = vpack.c.bf16 %v271, %v270
        %v286 = vpack.c.bf16 %v273, %v272
        %v287 = vpack.c.bf16 %v275, %v274
        %v288 = vpack.c.bf16 %v277, %v276
        %v289 = vpack.c.bf16 %v279, %v278
        %v290 = vpack.c.bf16 %v281, %v280
        %v291 = vpack.c.bf16 %v283, %v282
        %v292 = vld [vmem:[%s1] sm:$0xf]
        %v293 = vld [vmem:[%s1 + $0x4] sm:$0xf]
        %v294 = vld [vmem:[%s1 + $0x8] sm:$0xf]
        %v295 = vld [vmem:[%s1 + $0xc] sm:$0xf]
        %v296 = vld [vmem:[%s1 + $0x10] sm:$0xf]
        %v297 = vld [vmem:[%s1 + $0x14] sm:$0xf]
        %v298 = vld [vmem:[%s1 + $0x18] sm:$0xf]
        %v299 = vld [vmem:[%s1 + $0x1c] sm:$0xf]
        %v300 = vld [vmem:[%s1 + $0x20] sm:$0xf]
        %v301 = vld [vmem:[%s1 + $0x24] sm:$0xf]
        %v302 = vld [vmem:[%s1 + $0x28] sm:$0xf]
        %v303 = vld [vmem:[%s1 + $0x2c] sm:$0xf]
        %v304 = vld [vmem:[%s1 + $0x30] sm:$0xf]
        %v305 = vld [vmem:[%s1 + $0x34] sm:$0xf]
        %v306 = vld [vmem:[%s1 + $0x38] sm:$0xf]
        %v307 = vld [vmem:[%s1 + $0x3c] sm:$0xf]
        %v308 = vlaneseq
        %v309 = vshrl.u32 %v308, 7
        %v310 = vsub.s32 0, %v309
        %v311 = vrot.slane %v200, %v310
        %v328 = vunpack.c.l.b16 %v292
        %v329 = vunpack.c.l.b16 %v293
        %v330 = vunpack.c.l.b16 %v294
        %v331 = vunpack.c.l.b16 %v295
        %v332 = vunpack.c.l.b16 %v296
        %v333 = vunpack.c.l.b16 %v297
        %v334 = vunpack.c.l.b16 %v298
        %v335 = vunpack.c.l.b16 %v299
        %v336 = vunpack.c.l.b16 %v300
        %v337 = vunpack.c.l.b16 %v301
        %v338 = vunpack.c.l.b16 %v302
        %v339 = vunpack.c.l.b16 %v303
        %v340 = vunpack.c.l.b16 %v304
        %v341 = vunpack.c.l.b16 %v305
        %v342 = vunpack.c.l.b16 %v306
        %v343 = vunpack.c.l.b16 %v307
        %v344 = vpack.c.b16 %v329, %v328
        %v345 = vpack.c.b16 %v331, %v330
        %v346 = vpack.c.b16 %v333, %v332
        %v347 = vpack.c.b16 %v335, %v334
        %v348 = vpack.c.b16 %v337, %v336
        %v349 = vpack.c.b16 %v339, %v338
        %v350 = vpack.c.b16 %v341, %v340
        %v351 = vpack.c.b16 %v343, %v342
        %360 = vmatprep.subr.bf16.mxu0 0
        %361 = vmatpush1.bf16.msra.mxu0 %v344
        %362 = vmatprep.subr.bf16.mxu0 0
        %363 = vmatpush1.bf16.msra.mxu0 %v345
        %364 = vmatprep.subr.bf16.mxu0 0
        %365 = vmatpush1.bf16.msra.mxu0 %v346
        %366 = vmatprep.subr.bf16.mxu0 0
        %367 = vmatpush1.bf16.msra.mxu0 %v347
        %368 = vmatprep.subr.bf16.mxu0 0
        %369 = vmatpush1.bf16.msra.mxu0 %v348
        %370 = vmatprep.subr.bf16.mxu0 0
        %371 = vmatpush1.bf16.msra.mxu0 %v349
        %372 = vmatprep.subr.bf16.mxu0 0
        %373 = vmatpush1.bf16.msra.mxu0 %v350
        %374 = vmatprep.subr.bf16.mxu0 0
        %375 = vmatpush1.bf16.msra.mxu0 %v351
        %376 = vmatprep.subr.bf16.mxu0 0
        %377 = vmatpush1.bf16.msra.mxu0 0
        %378 = vmatprep.subr.bf16.mxu0 0
        %379 = vmatpush1.bf16.msra.mxu0 0
        %380 = vmatprep.subr.bf16.mxu0 0
        %381 = vmatpush1.bf16.msra.mxu0 0
        %382 = vmatprep.subr.bf16.mxu0 0
        %383 = vmatpush1.bf16.msra.mxu0 0
        %384 = vmatprep.subr.bf16.mxu0 0
        %385 = vmatpush1.bf16.msra.mxu0 0
        %386 = vmatprep.subr.bf16.mxu0 0
        %387 = vmatpush1.bf16.msra.mxu0 0
        %388 = vmatprep.subr.bf16.mxu0 0
        %389 = vmatpush1.bf16.msra.mxu0 0
        %390 = vmatprep.subr.bf16.mxu0 0
        %391 = vmatpush1.bf16.msra.mxu0 0
        %392 = vmatprep.mubr.bf16.mxu0 0
        %393 = vmatmul.mubr.bf16.gmra.mrb[0].mxu0 %v284
        %v394 = vpop.f32.mrb[0].mxu0
        %v395 = vadd.f32 %v311, %v394
        %v396 = vpop.f32.mrb[0].mxu0
        %v397 = vpop.f32.mrb[0].mxu0
        %v398 = vadd.f32 %v311, %v397
        %v399 = vpop.f32.mrb[0].mxu0
        %400 = vmatprep.mubr.bf16.mxu0 0
        %401 = vmatmul.mubr.bf16.gmra.mrb[0].mxu0 %v285
        %v402 = vpop.f32.mrb[0].mxu0
        %v403 = vadd.f32 %v311, %v402
        %v404 = vpop.f32.mrb[0].mxu0
        %v405 = vpop.f32.mrb[0].mxu0
        %v406 = vadd.f32 %v311, %v405
        %v407 = vpop.f32.mrb[0].mxu0
        %408 = vmatprep.mubr.bf16.mxu0 0
        %409 = vmatmul.mubr.bf16.gmra.mrb[0].mxu0 %v286
        %v410 = vpop.f32.mrb[0].mxu0
        %v411 = vadd.f32 %v311, %v410
        %v412 = vpop.f32.mrb[0].mxu0
        %v413 = vpop.f32.mrb[0].mxu0
        %v414 = vadd.f32 %v311, %v413
        %v415 = vpop.f32.mrb[0].mxu0
        %416 = vmatprep.mubr.bf16.mxu0 0
        %417 = vmatmul.mubr.bf16.gmra.mrb[0].mxu0 %v287
        %v418 = vpop.f32.mrb[0].mxu0
        %v419 = vadd.f32 %v311, %v418
        %v420 = vpop.f32.mrb[0].mxu0
        %v421 = vpop.f32.mrb[0].mxu0
        %v422 = vadd.f32 %v311, %v421
        %v423 = vpop.f32.mrb[0].mxu0
        %424 = vmatprep.mubr.bf16.mxu0 0
        %425 = vmatmul.mubr.bf16.gmra.mrb[0].mxu0 %v288
        %v426 = vpop.f32.mrb[0].mxu0
        %v427 = vadd.f32 %v311, %v426
        %v428 = vpop.f32.mrb[0].mxu0
        %v429 = vpop.f32.mrb[0].mxu0
        %v430 = vadd.f32 %v311, %v429
        %v431 = vpop.f32.mrb[0].mxu0
        %432 = vmatprep.mubr.bf16.mxu0 0
        %433 = vmatmul.mubr.bf16.gmra.mrb[0].mxu0 %v289
        %v434 = vpop.f32.mrb[0].mxu0
        %v435 = vadd.f32 %v311, %v434
        %v436 = vpop.f32.mrb[0].mxu0
        %v437 = vpop.f32.mrb[0].mxu0
        %v438 = vadd.f32 %v311, %v437
        %v439 = vpop.f32.mrb[0].mxu0
        %440 = vmatprep.mubr.bf16.mxu0 0
        %441 = vmatmul.mubr.bf16.gmra.mrb[0].mxu0 %v290
        %v442 = vpop.f32.mrb[0].mxu0
        %v443 = vadd.f32 %v311, %v442
        %v444 = vpop.f32.mrb[0].mxu0
        %v445 = vpop.f32.mrb[0].mxu0
        %v446 = vadd.f32 %v311, %v445
        %v447 = vpop.f32.mrb[0].mxu0
        %448 = vmatprep.mubr.bf16.mxu0 0
        %449 = vmatmul.mubr.bf16.gmra.mrb[0].mxu0 %v291
        %v450 = vpop.f32.mrb[0].mxu0
        %v451 = vadd.f32 %v311, %v450
        %v452 = vpop.f32.mrb[0].mxu0
        %v453 = vpop.f32.mrb[0].mxu0
        %v454 = vadd.f32 %v311, %v453
        %v455 = vpop.f32.mrb[0].mxu0
        %456 = vdwg.mxu0
        %vm457 = vcmp.gt.f32.partialorder %v395, 0.0
        %vm458 = vcmp.gt.f32.partialorder %v398, 0.0
        %vm459 = vcmp.gt.f32.partialorder %v403, 0.0
        %vm460 = vcmp.gt.f32.partialorder %v406, 0.0
        %vm461 = vcmp.gt.f32.partialorder %v411, 0.0
        %vm462 = vcmp.gt.f32.partialorder %v414, 0.0
        %vm463 = vcmp.gt.f32.partialorder %v419, 0.0
        %vm464 = vcmp.gt.f32.partialorder %v422, 0.0
        %vm465 = vcmp.gt.f32.partialorder %v427, 0.0
        %vm466 = vcmp.gt.f32.partialorder %v430, 0.0
        %vm467 = vcmp.gt.f32.partialorder %v435, 0.0
        %vm468 = vcmp.gt.f32.partialorder %v438, 0.0
        %vm469 = vcmp.gt.f32.partialorder %v443, 0.0
        %vm470 = vcmp.gt.f32.partialorder %v446, 0.0
        %vm471 = vcmp.gt.f32.partialorder %v451, 0.0
        %vm472 = vcmp.gt.f32.partialorder %v454, 0.0
        %v473 = vmul.f32 %v395, 0.01
        %v474 = vmul.f32 %v398, 0.01
        %v475 = vmul.f32 %v403, 0.01
        %v476 = vmul.f32 %v406, 0.01
        %v477 = vmul.f32 %v411, 0.01
        %v478 = vmul.f32 %v414, 0.01
        %v479 = vmul.f32 %v419, 0.01
        %v480 = vmul.f32 %v422, 0.01
        %v481 = vmul.f32 %v427, 0.01
        %v482 = vmul.f32 %v430, 0.01
        %v483 = vmul.f32 %v435, 0.01
        %v484 = vmul.f32 %v438, 0.01
        %v485 = vmul.f32 %v443, 0.01
        %v486 = vmul.f32 %v446, 0.01
        %v487 = vmul.f32 %v451, 0.01
        %v488 = vmul.f32 %v454, 0.01
        %v489 = vsel %vm457, %v395, %v473
        %v490 = vsel %vm458, %v398, %v474
        %v491 = vsel %vm459, %v403, %v475
        %v492 = vsel %vm460, %v406, %v476
        %v493 = vsel %vm461, %v411, %v477
        %v494 = vsel %vm462, %v414, %v478
        %v495 = vsel %vm463, %v419, %v479
        %v496 = vsel %vm464, %v422, %v480
        %v497 = vsel %vm465, %v427, %v481
        %v498 = vsel %vm466, %v430, %v482
        %v499 = vsel %vm467, %v435, %v483
        %v500 = vsel %vm468, %v438, %v484
        %v501 = vsel %vm469, %v443, %v485
        %v502 = vsel %vm470, %v446, %v486
        %v503 = vsel %vm471, %v451, %v487
        %v504 = vsel %vm472, %v454, %v488
        %v505 = vpack.c.bf16 %v490, %v489
        %v506 = vpack.c.bf16 %v492, %v491
        %v507 = vpack.c.bf16 %v494, %v493
        %v508 = vpack.c.bf16 %v496, %v495
        %v509 = vpack.c.bf16 %v498, %v497
        %v510 = vpack.c.bf16 %v500, %v499
        %v511 = vpack.c.bf16 %v502, %v501
        %v512 = vpack.c.bf16 %v504, %v503
        %v513 = vld [vmem:[%s2] sm:$0xf]
        %v514 = vld [vmem:[%s2 + $0x4] sm:$0xf]
        %v515 = vld [vmem:[%s2 + $0x8] sm:$0xf]
        %v516 = vld [vmem:[%s2 + $0xc] sm:$0xf]
        %v517 = vld [vmem:[%s2 + $0x10] sm:$0xf]
        %v518 = vld [vmem:[%s2 + $0x14] sm:$0xf]
        %v519 = vld [vmem:[%s2 + $0x18] sm:$0xf]
        %v520 = vld [vmem:[%s2 + $0x1c] sm:$0xf]
        %v521 = vld [vmem:[%s2 + $0x20] sm:$0xf]
        %v522 = vld [vmem:[%s2 + $0x24] sm:$0xf]
        %v523 = vld [vmem:[%s2 + $0x28] sm:$0xf]
        %v524 = vld [vmem:[%s2 + $0x2c] sm:$0xf]
        %v525 = vld [vmem:[%s2 + $0x30] sm:$0xf]
        %v526 = vld [vmem:[%s2 + $0x34] sm:$0xf]
        %v527 = vld [vmem:[%s2 + $0x38] sm:$0xf]
        %v528 = vld [vmem:[%s2 + $0x3c] sm:$0xf]
        %v529 = vlaneseq
        %v530 = vshrl.u32 %v529, 7
        %v531 = vsub.s32 0, %v530
        %v532 = vrot.slane %v201, %v531
        %v549 = vunpack.c.l.b16 %v513
        %v550 = vunpack.c.l.b16 %v514
        %v551 = vunpack.c.l.b16 %v515
        %v552 = vunpack.c.l.b16 %v516
        %v553 = vunpack.c.l.b16 %v517
        %v554 = vunpack.c.l.b16 %v518
        %v555 = vunpack.c.l.b16 %v519
        %v556 = vunpack.c.l.b16 %v520
        %v557 = vunpack.c.l.b16 %v521
        %v558 = vunpack.c.l.b16 %v522
        %v559 = vunpack.c.l.b16 %v523
        %v560 = vunpack.c.l.b16 %v524
        %v561 = vunpack.c.l.b16 %v525
        %v562 = vunpack.c.l.b16 %v526
        %v563 = vunpack.c.l.b16 %v527
        %v564 = vunpack.c.l.b16 %v528
        %v565 = vpack.c.b16 %v550, %v549
        %v566 = vpack.c.b16 %v552, %v551
        %v567 = vpack.c.b16 %v554, %v553
        %v568 = vpack.c.b16 %v556, %v555
        %v569 = vpack.c.b16 %v558, %v557
        %v570 = vpack.c.b16 %v560, %v559
        %v571 = vpack.c.b16 %v562, %v561
        %v572 = vpack.c.b16 %v564, %v563
        %581 = vmatprep.subr.bf16.mxu0 0
        %582 = vmatpush1.bf16.msra.mxu0 %v565
        %583 = vmatprep.subr.bf16.mxu0 0
        %584 = vmatpush1.bf16.msra.mxu0 %v566
        %585 = vmatprep.subr.bf16.mxu0 0
        %586 = vmatpush1.bf16.msra.mxu0 %v567
        %587 = vmatprep.subr.bf16.mxu0 0
        %588 = vmatpush1.bf16.msra.mxu0 %v568
        %589 = vmatprep.subr.bf16.mxu0 0
        %590 = vmatpush1.bf16.msra.mxu0 %v569
        %591 = vmatprep.subr.bf16.mxu0 0
        %592 = vmatpush1.bf16.msra.mxu0 %v570
        %593 = vmatprep.subr.bf16.mxu0 0
        %594 = vmatpush1.bf16.msra.mxu0 %v571
        %595 = vmatprep.subr.bf16.mxu0 0
        %596 = vmatpush1.bf16.msra.mxu0 %v572
        %597 = vmatprep.subr.bf16.mxu0 0
        %598 = vmatpush1.bf16.msra.mxu0 0
        %599 = vmatprep.subr.bf16.mxu0 0
        %600 = vmatpush1.bf16.msra.mxu0 0
        %601 = vmatprep.subr.bf16.mxu0 0
        %602 = vmatpush1.bf16.msra.mxu0 0
        %603 = vmatprep.subr.bf16.mxu0 0
        %604 = vmatpush1.bf16.msra.mxu0 0
        %605 = vmatprep.subr.bf16.mxu0 0
        %606 = vmatpush1.bf16.msra.mxu0 0
        %607 = vmatprep.subr.bf16.mxu0 0
        %608 = vmatpush1.bf16.msra.mxu0 0
        %609 = vmatprep.subr.bf16.mxu0 0
        %610 = vmatpush1.bf16.msra.mxu0 0
        %611 = vmatprep.subr.bf16.mxu0 0
        %612 = vmatpush1.bf16.msra.mxu0 0
        %613 = vmatprep.mubr.bf16.mxu0 0
        %614 = vmatmul.mubr.bf16.gmra.mrb[0].mxu0 %v505
        %v615 = vpop.f32.mrb[0].mxu0
        %v616 = vadd.f32 %v532, %v615
        %v617 = vpop.f32.mrb[0].mxu0
        %v618 = vpop.f32.mrb[0].mxu0
        %v619 = vadd.f32 %v532, %v618
        %v620 = vpop.f32.mrb[0].mxu0
        %621 = vmatprep.mubr.bf16.mxu0 0
        %622 = vmatmul.mubr.bf16.gmra.mrb[0].mxu0 %v506
        %v623 = vpop.f32.mrb[0].mxu0
        %v624 = vadd.f32 %v532, %v623
        %v625 = vpop.f32.mrb[0].mxu0
        %v626 = vpop.f32.mrb[0].mxu0
        %v627 = vadd.f32 %v532, %v626
        %v628 = vpop.f32.mrb[0].mxu0
        %629 = vmatprep.mubr.bf16.mxu0 0
        %630 = vmatmul.mubr.bf16.gmra.mrb[0].mxu0 %v507
        %v631 = vpop.f32.mrb[0].mxu0
        %v632 = vadd.f32 %v532, %v631
        %v633 = vpop.f32.mrb[0].mxu0
        %v634 = vpop.f32.mrb[0].mxu0
        %v635 = vadd.f32 %v532, %v634
        %v636 = vpop.f32.mrb[0].mxu0
        %637 = vmatprep.mubr.bf16.mxu0 0
        %638 = vmatmul.mubr.bf16.gmra.mrb[0].mxu0 %v508
        %v639 = vpop.f32.mrb[0].mxu0
        %v640 = vadd.f32 %v532, %v639
        %v641 = vpop.f32.mrb[0].mxu0
        %v642 = vpop.f32.mrb[0].mxu0
        %v643 = vadd.f32 %v532, %v642
        %v644 = vpop.f32.mrb[0].mxu0
        %645 = vmatprep.mubr.bf16.mxu0 0
        %646 = vmatmul.mubr.bf16.gmra.mrb[0].mxu0 %v509
        %v647 = vpop.f32.mrb[0].mxu0
        %v648 = vadd.f32 %v532, %v647
        %v649 = vpop.f32.mrb[0].mxu0
        %v650 = vpop.f32.mrb[0].mxu0
        %v651 = vadd.f32 %v532, %v650
        %v652 = vpop.f32.mrb[0].mxu0
        %653 = vmatprep.mubr.bf16.mxu0 0
        %654 = vmatmul.mubr.bf16.gmra.mrb[0].mxu0 %v510
        %v655 = vpop.f32.mrb[0].mxu0
        %v656 = vadd.f32 %v532, %v655
        %v657 = vpop.f32.mrb[0].mxu0
        %v658 = vpop.f32.mrb[0].mxu0
        %v659 = vadd.f32 %v532, %v658
        %v660 = vpop.f32.mrb[0].mxu0
        %661 = vmatprep.mubr.bf16.mxu0 0
        %662 = vmatmul.mubr.bf16.gmra.mrb[0].mxu0 %v511
        %v663 = vpop.f32.mrb[0].mxu0
        %v664 = vadd.f32 %v532, %v663
        %v665 = vpop.f32.mrb[0].mxu0
        %v666 = vpop.f32.mrb[0].mxu0
        %v667 = vadd.f32 %v532, %v666
        %v668 = vpop.f32.mrb[0].mxu0
        %669 = vmatprep.mubr.bf16.mxu0 0
        %670 = vmatmul.mubr.bf16.gmra.mrb[0].mxu0 %v512
        %v671 = vpop.f32.mrb[0].mxu0
        %v672 = vadd.f32 %v532, %v671
        %v673 = vpop.f32.mrb[0].mxu0
        %v674 = vpop.f32.mrb[0].mxu0
        %v675 = vadd.f32 %v532, %v674
        %v676 = vpop.f32.mrb[0].mxu0
        %677 = vdwg.mxu0
        %vm678 = vcmp.gt.f32.partialorder %v616, 0.0
        %vm679 = vcmp.gt.f32.partialorder %v619, 0.0
        %vm680 = vcmp.gt.f32.partialorder %v624, 0.0
        %vm681 = vcmp.gt.f32.partialorder %v627, 0.0
        %vm682 = vcmp.gt.f32.partialorder %v632, 0.0
        %vm683 = vcmp.gt.f32.partialorder %v635, 0.0
        %vm684 = vcmp.gt.f32.partialorder %v640, 0.0
        %vm685 = vcmp.gt.f32.partialorder %v643, 0.0
        %vm686 = vcmp.gt.f32.partialorder %v648, 0.0
        %vm687 = vcmp.gt.f32.partialorder %v651, 0.0
        %vm688 = vcmp.gt.f32.partialorder %v656, 0.0
        %vm689 = vcmp.gt.f32.partialorder %v659, 0.0
        %vm690 = vcmp.gt.f32.partialorder %v664, 0.0
        %vm691 = vcmp.gt.f32.partialorder %v667, 0.0
        %vm692 = vcmp.gt.f32.partialorder %v672, 0.0
        %vm693 = vcmp.gt.f32.partialorder %v675, 0.0
        %v694 = vmul.f32 %v616, 0.01
        %v695 = vmul.f32 %v619, 0.01
        %v696 = vmul.f32 %v624, 0.01
        %v697 = vmul.f32 %v627, 0.01
        %v698 = vmul.f32 %v632, 0.01
        %v699 = vmul.f32 %v635, 0.01
        %v700 = vmul.f32 %v640, 0.01
        %v701 = vmul.f32 %v643, 0.01
        %v702 = vmul.f32 %v648, 0.01
        %v703 = vmul.f32 %v651, 0.01
        %v704 = vmul.f32 %v656, 0.01
        %v705 = vmul.f32 %v659, 0.01
        %v706 = vmul.f32 %v664, 0.01
        %v707 = vmul.f32 %v667, 0.01
        %v708 = vmul.f32 %v672, 0.01
        %v709 = vmul.f32 %v675, 0.01
        %v710 = vsel %vm678, %v616, %v694
        %v711 = vsel %vm679, %v619, %v695
        %v712 = vsel %vm680, %v624, %v696
        %v713 = vsel %vm681, %v627, %v697
        %v714 = vsel %vm682, %v632, %v698
        %v715 = vsel %vm683, %v635, %v699
        %v716 = vsel %vm684, %v640, %v700
        %v717 = vsel %vm685, %v643, %v701
        %v718 = vsel %vm686, %v648, %v702
        %v719 = vsel %vm687, %v651, %v703
        %v720 = vsel %vm688, %v656, %v704
        %v721 = vsel %vm689, %v659, %v705
        %v722 = vsel %vm690, %v664, %v706
        %v723 = vsel %vm691, %v667, %v707
        %v724 = vsel %vm692, %v672, %v708
        %v725 = vsel %vm693, %v675, %v709
        %v726 = vlaneseq
        %v727 = vshrl.u32 %v726, 7
        %v728 = vsub.s32 0, %v727
        %v729 = vrot.slane %v202, %v728
        %v730 = vmul.f32 %v710, %v729
        %v731 = vmul.f32 %v711, %v729
        %v732 = vmul.f32 %v712, %v729
        %v733 = vmul.f32 %v713, %v729
        %v734 = vmul.f32 %v714, %v729
        %v735 = vmul.f32 %v715, %v729
        %v736 = vmul.f32 %v716, %v729
        %v737 = vmul.f32 %v717, %v729
        %v738 = vmul.f32 %v718, %v729
        %v739 = vmul.f32 %v719, %v729
        %v740 = vmul.f32 %v720, %v729
        %v741 = vmul.f32 %v721, %v729
        %v742 = vmul.f32 %v722, %v729
        %v743 = vmul.f32 %v723, %v729
        %v744 = vmul.f32 %v724, %v729
        %v745 = vmul.f32 %v725, %v729
        %v746 = vlaneseq
        %v747 = vshrl.u32 %v746, 7
        %v748 = vsub.s32 0, %v747
        %v749 = vrot.slane %v203, %v748
        %v750 = vadd.f32 %v730, %v749
        %v751 = vadd.f32 %v731, %v749
        %v752 = vadd.f32 %v732, %v749
        %v753 = vadd.f32 %v733, %v749
        %v754 = vadd.f32 %v734, %v749
        %v755 = vadd.f32 %v735, %v749
        %v756 = vadd.f32 %v736, %v749
        %v757 = vadd.f32 %v737, %v749
        %v758 = vadd.f32 %v738, %v749
        %v759 = vadd.f32 %v739, %v749
        %v760 = vadd.f32 %v740, %v749
        %v761 = vadd.f32 %v741, %v749
        %v762 = vadd.f32 %v742, %v749
        %v763 = vadd.f32 %v743, %v749
        %v764 = vadd.f32 %v744, %v749
        %v765 = vadd.f32 %v745, %v749
        %766 = vst [vmem:[%s191] sm:$0xff] %v750
        %767 = vst [vmem:[%s191 + $0x8] sm:$0xff] %v751
        %768 = vst [vmem:[%s191 + $0x10] sm:$0xff] %v752
        %769 = vst [vmem:[%s191 + $0x18] sm:$0xff] %v753
        %770 = vst [vmem:[%s191 + $0x20] sm:$0xff] %v754
        %771 = vst [vmem:[%s191 + $0x28] sm:$0xff] %v755
        %772 = vst [vmem:[%s191 + $0x30] sm:$0xff] %v756
        %773 = vst [vmem:[%s191 + $0x38] sm:$0xff] %v757
        %774 = vst [vmem:[%s191 + $0x40] sm:$0xff] %v758
        %775 = vst [vmem:[%s191 + $0x48] sm:$0xff] %v759
        %776 = vst [vmem:[%s191 + $0x50] sm:$0xff] %v760
        %777 = vst [vmem:[%s191 + $0x58] sm:$0xff] %v761
        %778 = vst [vmem:[%s191 + $0x60] sm:$0xff] %v762
        %779 = vst [vmem:[%s191 + $0x68] sm:$0xff] %v763
        %780 = vst [vmem:[%s191 + $0x70] sm:$0xff] %v764
        %781 = vst [vmem:[%s191 + $0x78] sm:$0xff] %v765
        %s782 = sand.u32 %s115, 1
        %s783 = scalar_lea.sflag [#allocation3], %s782
        %s784 = sand.u32 %s115, 1
        %s785 = smul.addr %s784, 128
        %s786 = scalar_lea.vmem [#allocation2], %s785
        // Predicated region
        $region37: #{dti_conv_graph3_layer.1} parent=35 // pred_check
          %p787 = pneg %p125
        $region38: #{dti_conv_graph3_layer.1} parent=35 // pred_check_branch
          %789 = sbr.rel (%p787) target = $region40
        $region39: #{dti_conv_graph3_layer.1} parent=35 // pred_region
          %s790 = smul.u32 16, %s18
          %s792 = ssub.s32 2048, 2048
          %793 = vsyncadd %s783, %s792
          %s794 = smul.addr %s790, 128
          %s795 = scalar_lea.hbm %s4, %s794
          %s796 = sshll.u32 %s786, 4
          %s797 = int_to_ptr.vmem [resolvable:$true] %s796
          %802 = dma.vmem_to_hbm [thread:$0]  %s797, 2048, %s795, %s783, 128, 128, 8
        $region40: #{dti_conv_graph3_layer.1} parent=35 // pred_fallthru
          _
      $region36: #{dti_conv_graph3_layer.1} parent=5 // pred_fallthru
        _
      %p803 = scmp.le.s32.totalorder 2, %s13
      // Predicated region
      $region41: #{dti_conv_graph3_layer.1} parent=5 // pred_check
        %p804 = pneg %p803
      $region42: #{dti_conv_graph3_layer.1} parent=5 // pred_check_branch
        %806 = sbr.rel (%p804) target = $region44
      $region43: #{dti_conv_graph3_layer.1} parent=5 // pred_region
        %s807 = ssub.s32 %s13, 2
        // Predicated region
        $region45: #{dti_conv_graph3_layer.1} parent=43 // pred_check
          %p808 = pneg %p131
        $region46: #{dti_conv_graph3_layer.1} parent=43 // pred_check_branch
          %810 = sbr.rel (%p808) target = $region48
        $region47: #{dti_conv_graph3_layer.1} parent=43 // pred_region
          %s811 = sand.u32 %s116, 1
          %s812 = scalar_lea.sflag [#allocation3], %s811
          %s813 = sand.u32 %s116, 1
          %s814 = smul.addr %s813, 128
          %s815 = scalar_lea.vmem [#allocation2], %s814
          %816 = dma.done %s812, 2048
        $region48: #{dti_conv_graph3_layer.1} parent=43 // pred_fallthru
          _
      $region44: #{dti_conv_graph3_layer.1} parent=5 // pred_fallthru
        _
    $region6: #{dti_conv_graph3_layer.1} parent=1 // loop_footer
      %s17 = sadd.s32 1, %s13
    $region7: #{dti_conv_graph3_layer.1} parent=1 // loop_footer_branch
      %12 = sbr.rel target = $region3
    $region8: #{dti_conv_graph3_layer.1} parent=1 // loop_exit
      _
    %817 = vsyncpa [#allocation3], 1
    %s818 = scalar_lea.sflag [#allocation3], 1
    %819 = vsyncpa %s818, 1

</llo_original>
